<compile_context>
chip_gen: v7x
topology: tpu7x:2x2x1
jax: 0.10.0
libtpu: 0.0.40
codegen_flags: <defaults>
</compile_context>

<pallas_src>
import functools

import jax
import jax.numpy as jnp
from jax import lax
from jax.experimental import pallas as pl
from jax.experimental.pallas import tpu as pltpu


def _round_up(n, m):
    return ((n + m - 1) // m) * m


def _vmem_capacity_bytes():
    """Physical per-core VMEM; conservative (v7x, 64 MiB) fallback if unqueryable."""
    try:
        cap = getattr(pltpu.get_tpu_info(), "vmem_capacity_bytes", None)
        if cap:
            return int(cap)
    except Exception:
        pass
    return 64 * 1024 * 1024


def _vmem_working_set(bm, tp, E, x_bytes, w_bytes, out_bytes):
    """Approx. VMEM bytes of one grid step's blocks (double-buffered) + scratch."""
    rm, rt = _round_up(bm, 8), _round_up(tp, 128)
    rEl, rEs = _round_up(E, 128), _round_up(E, 8)
    return (2 * rm * rt * x_bytes                     # x tile
            + 2 * rEs * rt * w_bytes                  # W_enc tile (E, tp)
            + 2 * _round_up(tp, 8) * rEl * w_bytes    # W_dec tile (tp, E)
            + 2 * rm * rt * out_bytes                 # out tile
            + 2 * 8 * rEl * 4 + 2 * 8 * rt * 4        # biases (f32)
            + rm * rEl * 4)                           # f32 accumulator scratch


def _pick_tp(P, bm, E, x_bytes, w_bytes, out_bytes, budget):
    """Largest feature tile (multiple of 128, or full P) whose blocks fit budget."""
    if _vmem_working_set(bm, P, E, x_bytes, w_bytes, out_bytes) <= budget:
        return P
    hi = min(_round_up(P, 128), 4096)
    for cand in range(hi, 128, -128):
        if _vmem_working_set(bm, cand, E, x_bytes, w_bytes, out_bytes) <= budget:
            return cand
    return 128


_NT = (((1,), (1,)), ((), ()))   # contract last dim of both operands: a @ b^T


def _ae_kernel(x_ref, we_ref, be_ref, wd_ref, bd_ref, o_ref, acc_ref,
               *, n_p, tp, P):
    """One grid step.  Phase axis t: [0, n_p) encoder accumulation,
    [n_p, 2*n_p) decoder output tiles."""
    t = pl.program_id(1)

    @pl.when(t == 0)
    def _init():
        # Accumulator starts at the encoder bias (added once, in f32).
        acc_ref[...] = jnp.broadcast_to(be_ref[...], acc_ref.shape)

    @pl.when(t < n_p)
    def _encode():
        we = we_ref[...]                              # (E, tp)
        xs = x_ref[...].astype(we.dtype)              # (bm, tp) -> compute dtype
        if P % tp != 0:
            # Tail tile on the contraction axis: columns >= P hold unspecified
            # bytes; zero both operands so they cannot pollute the accumulator.
            col = t * tp + lax.broadcasted_iota(jnp.int32, (1, tp), 1)
            valid = col < P
            xs = jnp.where(valid, xs, jnp.zeros((), xs.dtype))
            we = jnp.where(valid, we, jnp.zeros((), we.dtype))
        acc_ref[...] += lax.dot_general(xs, we, _NT,
                                        preferred_element_type=jnp.float32)

    @pl.when(t >= n_p)
    def _decode():
        wd = wd_ref[...]                              # (tp, E)
        enc = acc_ref[...].astype(wd.dtype)           # (bm, E)
        dec = lax.dot_general(enc, wd, _NT,
                              preferred_element_type=jnp.float32) + bd_ref[...]
        o_ref[...] = dec.astype(o_ref.dtype)


def prepare_params(w_enc, b_enc, w_dec, b_dec, compute_dtype=jnp.bfloat16):
    """One-time parameter prep: cast weights to the MXU compute dtype (biases
    stay f32).  Do this once, outside the per-call hot path."""
    return (w_enc.astype(compute_dtype), b_enc,
            w_dec.astype(compute_dtype), b_dec)


def linear_autoencoder_forward(x, w_enc, b_enc, w_dec, b_dec, *,
                               bm=256, tp=None, vmem_budget_bytes=None):
    """
    x:     (..., num_products)            activations (f32 typical)
    w_enc: (embedding, num_products)      PyTorch nn.Linear weight layout (out, in)
    b_enc: (embedding,)
    w_dec: (num_products, embedding)
    b_dec: (num_products,)
    Compute dtype = weight dtype (pre-cast via prepare_params for bf16 MXU path).
    """
    orig_shape = x.shape
    P = orig_shape[-1]
    x2 = x.reshape(-1, P)
    B = x2.shape[0]
    E = w_enc.shape[0]
    assert w_enc.shape == (E, P) and w_dec.shape == (P, E)
    assert b_enc.shape == (E,) and b_dec.shape == (P,)
    assert w_enc.dtype == w_dec.dtype

    out_dtype = x2.dtype
    be2 = b_enc.reshape(1, E).astype(jnp.float32)
    bd2 = b_dec.reshape(1, P).astype(jnp.float32)

    xb = jnp.dtype(x2.dtype).itemsize
    wb = jnp.dtype(w_enc.dtype).itemsize
    ob = jnp.dtype(out_dtype).itemsize

    # ---- tile selection ------------------------------------------------------
    bm_eff = B if B <= bm else _round_up(bm, 8)
    cap = _vmem_capacity_bytes()
    budget = vmem_budget_bytes if vmem_budget_bytes is not None else (55 * cap) // 100
    if tp is None:
        tp = _pick_tp(P, bm_eff, E, xb, wb, ob, budget)
        if (tp == 128 and bm_eff > 128
                and _vmem_working_set(bm_eff, tp, E, xb, wb, ob) > budget):
            bm_eff = min(B, 128)      # last resort on tight-VMEM chips (v7x)
            tp = _pick_tp(P, bm_eff, E, xb, wb, ob, budget)
    else:
        tp = P if tp >= P else _round_up(tp, 128)

    n_p = pl.cdiv(P, tp)
    nb = pl.cdiv(B, bm_eff)
    grid = (nb, 2 * n_p)

    est = _vmem_working_set(bm_eff, tp, E, xb, wb, ob)
    vmem_limit = int(min(cap, max(32 * 1024 * 1024, int(est * 1.3) + (2 << 20))))

    cost = pl.CostEstimate(
        flops=4 * B * P * E,                       # two (B,P,E) matmuls
        transcendentals=0,
        bytes_accessed=int(B * P * (xb + ob) + nb * 2 * P * E * wb
                           + (E + P) * 4),
    )

    kernel = functools.partial(_ae_kernel, n_p=n_p, tp=tp, P=P)

    out = pl.pallas_call(
        kernel,
        out_shape=jax.ShapeDtypeStruct((B, P), out_dtype),
        grid_spec=pltpu.PrefetchScalarGridSpec(
            num_scalar_prefetch=0,
            grid=grid,
            in_specs=[
                pl.BlockSpec((bm_eff, tp),
                             lambda i, t: (i, jnp.minimum(t, n_p - 1))),   # x
                pl.BlockSpec((E, tp),
                             lambda i, t: (0, jnp.minimum(t, n_p - 1))),   # W_enc
                pl.BlockSpec((1, E), lambda i, t: (0, 0)),                 # b_enc
                pl.BlockSpec((tp, E),
                             lambda i, t: (jnp.maximum(t - n_p, 0), 0)),   # W_dec
                pl.BlockSpec((1, tp),
                             lambda i, t: (0, jnp.maximum(t - n_p, 0))),   # b_dec
            ],
            out_specs=pl.BlockSpec(
                (bm_eff, tp), lambda i, t: (i, jnp.maximum(t - n_p, 0))),
            scratch_shapes=[pltpu.VMEM((bm_eff, E), jnp.float32)],
        ),
        compiler_params=pltpu.CompilerParams(
            dimension_semantics=("parallel", "arbitrary"),
            vmem_limit_bytes=vmem_limit,
        ),
        cost_estimate=cost,
    )(x2, w_enc, be2, w_dec, bd2)

    return out.reshape(orig_shape)


def _torch_linear_init(key, out_features, in_features):
    """Deterministic init matching nn.Linear default: U(-1/sqrt(in), 1/sqrt(in))."""
    k_w, k_b = jax.random.split(key)
    bound = 1.0 / jnp.sqrt(jnp.float32(in_features))
    w = jax.random.uniform(k_w, (out_features, in_features),
                           minval=-bound, maxval=bound, dtype=jnp.float32)
    b = jax.random.uniform(k_b, (out_features,),
                           minval=-bound, maxval=bound, dtype=jnp.float32)
    return w, b


if __name__ == "__main__":
    key = jax.random.PRNGKey(0)
    (k_x, k_enc, k_dec,
     k_x2, k_enc2, k_dec2,
     k_x3, k_enc3, k_dec3) = jax.random.split(key, 9)

    # Case 1: canonical small shapes (whole-feature blocks, grid = (1, 2)).
    B, P, E = 8, 256, 128
    x = jax.random.normal(k_x, (B, P), dtype=jnp.float32)
    w_enc, b_enc = _torch_linear_init(k_enc, E, P)
    w_dec, b_dec = _torch_linear_init(k_dec, P, E)
    ref = (x @ w_enc.T + b_enc) @ w_dec.T + b_dec
    out = jax.block_until_ready(
        linear_autoencoder_forward(x, w_enc, b_enc, w_dec, b_dec))
    assert out.shape == (B, P)
    assert jnp.allclose(out, ref, atol=1e-4, rtol=1e-4)

    # Case 2: streamed-weight path (forced tp=128 -> 3 enc + 3 dec tiles) with a
    #         ragged, non-multiple-of-8 batch.
    B2, P2 = 20, 384
    x2 = jax.random.normal(k_x2, (B2, P2), dtype=jnp.float32)
    w_enc2, b_enc2 = _torch_linear_init(k_enc2, E, P2)
    w_dec2, b_dec2 = _torch_linear_init(k_dec2, P2, E)
    ref2 = (x2 @ w_enc2.T + b_enc2) @ w_dec2.T + b_dec2
    out2 = jax.block_until_ready(
        linear_autoencoder_forward(x2, w_enc2, b_enc2, w_dec2, b_dec2, tp=128))
    assert out2.shape == (B2, P2)
    assert jnp.allclose(out2, ref2, atol=1e-4, rtol=1e-4)

    # Case 3: num_products not a multiple of the feature tile -> exercises the
    #         in-kernel contraction-tail masking and boundary output tiles.
    B3, P3 = 12, 200
    x3 = jax.random.normal(k_x3, (B3, P3), dtype=jnp.float32)
    w_enc3, b_enc3 = _torch_linear_init(k_enc3, E, P3)
    w_dec3, b_dec3 = _torch_linear_init(k_dec3, P3, E)
    ref3 = (x3 @ w_enc3.T + b_enc3) @ w_dec3.T + b_dec3
    out3 = jax.block_until_ready(
        linear_autoencoder_forward(x3, w_enc3, b_enc3, w_dec3, b_dec3, tp=128))
    assert out3.shape == (B3, P3)
    assert jnp.allclose(out3, ref3, atol=1e-4, rtol=1e-4)

    # Case 4: bf16 weights pre-cast once at prep time (native MXU path,
    #         f32 accumulation / biases / output).
    wb_enc, _, wb_dec, _ = prepare_params(w_enc, b_enc, w_dec, b_dec)
    out_bf = jax.block_until_ready(
        linear_autoencoder_forward(x, wb_enc, b_enc, wb_dec, b_dec))
    assert out_bf.shape == (B, P)
    assert jnp.allclose(out_bf, ref, atol=3e-2, rtol=3e-2)

    print("KERNEL_OK")
</pallas_src>

<mosaic_0001>
module attributes {stable_mosaic.version = 11 : i64} {
  func.func @_ae_kernel(%arg0: i32, %arg1: i32, %arg2: memref<8x256xf32, #tpu.memory_space<vmem>>, %arg3: memref<128x256xf32, #tpu.memory_space<vmem>>, %arg4: memref<1x128xf32, #tpu.memory_space<vmem>>, %arg5: memref<256x128xf32, #tpu.memory_space<vmem>>, %arg6: memref<1x256xf32, #tpu.memory_space<vmem>>, %arg7: memref<8x256xf32, #tpu.memory_space<vmem>>, %arg8: memref<8x128xf32, #tpu.memory_space<vmem>>) attributes {dimension_semantics = [#tpu.dimension_semantics<parallel>, #tpu.dimension_semantics<arbitrary>], iteration_bounds = array<i64: 1, 2>, scalar_prefetch = 0 : i64, scratch_operands = 1 : i64, tpu.core_type = #tpu.core_type<tc>, window_params = [{transform_indices = @transform_0, window_bounds = array<i64: 8, 256>}, {transform_indices = @transform_1, window_bounds = array<i64: 128, 256>}, {pipeline_mode = #tpu.pipeline_mode<synchronous>, transform_indices = @transform_2, window_bounds = array<i64: 1, 128>}, {transform_indices = @transform_3, window_bounds = array<i64: 256, 128>}, {transform_indices = @transform_4, window_bounds = array<i64: 1, 256>}, {transform_indices = @transform_5, window_bounds = array<i64: 8, 256>}]} {
    %c0_i32 = arith.constant 0 : i32
    %0 = arith.cmpi eq, %arg1, %c0_i32 : i32
    %1 = arith.extui %0 : i1 to i32
    %c0_i32_0 = arith.constant 0 : i32
    %2 = arith.cmpi ne, %1, %c0_i32_0 : i32
    scf.if %2 {
      %c0 = arith.constant 0 : index
      %c0_4 = arith.constant 0 : index
      %9 = vector.load %arg4[%c0, %c0_4] : memref<1x128xf32, #tpu.memory_space<vmem>>, vector<1x128xf32>
      %10 = vector.shape_cast %9 : vector<1x128xf32> to vector<1x128xf32>
      %11 = vector.broadcast %10 : vector<1x128xf32> to vector<8x128xf32>
      %c0_5 = arith.constant 0 : index
      %c0_6 = arith.constant 0 : index
      %12 = vector.load %arg8[%c0_5, %c0_6] : memref<8x128xf32, #tpu.memory_space<vmem>>, vector<8x128xf32>
      tpu.vector_store %arg8[%c0_5, %c0_6], %11 {strides = array<i32>} : memref<8x128xf32, #tpu.memory_space<vmem>>, vector<8x128xf32>,
    } else {
    }
    %c1_i32 = arith.constant 1 : i32
    %3 = arith.cmpi slt, %arg1, %c1_i32 : i32
    %4 = arith.extui %3 : i1 to i32
    %c0_i32_1 = arith.constant 0 : i32
    %5 = arith.cmpi ne, %4, %c0_i32_1 : i32
    scf.if %5 {
      %c0 = arith.constant 0 : index
      %c0_4 = arith.constant 0 : index
      %9 = vector.load %arg3[%c0, %c0_4] : memref<128x256xf32, #tpu.memory_space<vmem>>, vector<128x256xf32>
      %c0_5 = arith.constant 0 : index
      %c0_6 = arith.constant 0 : index
      %10 = vector.load %arg2[%c0_5, %c0_6] : memref<8x256xf32, #tpu.memory_space<vmem>>, vector<8x256xf32>
      %c0_7 = arith.constant 0 : index
      %c0_8 = arith.constant 0 : index
      %11 = vector.load %arg8[%c0_7, %c0_8] : memref<8x128xf32, #tpu.memory_space<vmem>>, vector<8x128xf32>
      %cst = arith.constant dense<0.000000e+00> : vector<8x128xf32>
      %12 = tpu.matmul %10, %9, %cst {dimension_numbers = #tpu.dot_dimension_numbers<[1], [1], [0], [0], [0, 0, 1, 0], [], []>} : vector<8x256xf32>, vector<128x256xf32>, vector<8x128xf32> -> vector<8x128xf32>
      %13 = arith.addf %11, %12 : vector<8x128xf32>
      %c0_9 = arith.constant 0 : index
      %c0_10 = arith.constant 0 : index
      %14 = vector.load %arg8[%c0_9, %c0_10] : memref<8x128xf32, #tpu.memory_space<vmem>>, vector<8x128xf32>
      tpu.vector_store %arg8[%c0_9, %c0_10], %13 {strides = array<i32>} : memref<8x128xf32, #tpu.memory_space<vmem>>, vector<8x128xf32>,
    } else {
    }
    %c1_i32_2 = arith.constant 1 : i32
    %6 = arith.cmpi sge, %arg1, %c1_i32_2 : i32
    %7 = arith.extui %6 : i1 to i32
    %c0_i32_3 = arith.constant 0 : i32
    %8 = arith.cmpi ne, %7, %c0_i32_3 : i32
    scf.if %8 {
      %c0 = arith.constant 0 : index
      %c0_4 = arith.constant 0 : index
      %9 = vector.load %arg5[%c0, %c0_4] : memref<256x128xf32, #tpu.memory_space<vmem>>, vector<256x128xf32>
      %c0_5 = arith.constant 0 : index
      %c0_6 = arith.constant 0 : index
      %10 = vector.load %arg8[%c0_5, %c0_6] : memref<8x128xf32, #tpu.memory_space<vmem>>, vector<8x128xf32>
      %cst = arith.constant dense<0.000000e+00> : vector<8x256xf32>
      %11 = tpu.matmul %10, %9, %cst {dimension_numbers = #tpu.dot_dimension_numbers<[1], [1], [0], [0], [0, 0, 1, 0], [], []>} : vector<8x128xf32>, vector<256x128xf32>, vector<8x256xf32> -> vector<8x256xf32>
      %c0_7 = arith.constant 0 : index
      %c0_8 = arith.constant 0 : index
      %12 = vector.load %arg6[%c0_7, %c0_8] : memref<1x256xf32, #tpu.memory_space<vmem>>, vector<1x256xf32>
      %13 = vector.broadcast %12 : vector<1x256xf32> to vector<8x256xf32>
      %14 = arith.addf %11, %13 : vector<8x256xf32>
      %c0_9 = arith.constant 0 : index
      %c0_10 = arith.constant 0 : index
      %15 = vector.load %arg7[%c0_9, %c0_10] : memref<8x256xf32, #tpu.memory_space<vmem>>, vector<8x256xf32>
      tpu.vector_store %arg7[%c0_9, %c0_10], %14 {strides = array<i32>} : memref<8x256xf32, #tpu.memory_space<vmem>>, vector<8x256xf32>,
    } else {
    }
    return
  }
  func.func @transform_0(%arg0: i32, %arg1: i32) -> (i32, i32) {
    %c0_i32 = arith.constant 0 : i32
    %0 = arith.minsi %arg1, %c0_i32 : i32
    %c0_i32_0 = arith.constant 0 : i32
    return %arg0, %0 : i32, i32
  }
  func.func @transform_1(%arg0: i32, %arg1: i32) -> (i32, i32) {
    %c0_i32 = arith.constant 0 : i32
    %0 = arith.minsi %arg1, %c0_i32 : i32
    %c0_i32_0 = arith.constant 0 : i32
    %c0_i32_1 = arith.constant 0 : i32
    return %c0_i32_0, %0 : i32, i32
  }
  func.func @transform_2(%arg0: i32, %arg1: i32) -> (i32, i32) {
    %c0_i32 = arith.constant 0 : i32
    %c0_i32_0 = arith.constant 0 : i32
    %c0_i32_1 = arith.constant 0 : i32
    return %c0_i32, %c0_i32_0 : i32, i32
  }
  func.func @transform_3(%arg0: i32, %arg1: i32) -> (i32, i32) {
    %c1_i32 = arith.constant 1 : i32
    %0 = arith.subi %arg1, %c1_i32 : i32
    %c0_i32 = arith.constant 0 : i32
    %1 = arith.maxsi %0, %c0_i32 : i32
    %c0_i32_0 = arith.constant 0 : i32
    %c0_i32_1 = arith.constant 0 : i32
    return %1, %c0_i32_0 : i32, i32
  }
  func.func @transform_4(%arg0: i32, %arg1: i32) -> (i32, i32) {
    %c1_i32 = arith.constant 1 : i32
    %0 = arith.subi %arg1, %c1_i32 : i32
    %c0_i32 = arith.constant 0 : i32
    %1 = arith.maxsi %0, %c0_i32 : i32
    %c0_i32_0 = arith.constant 0 : i32
    %c0_i32_1 = arith.constant 0 : i32
    return %c0_i32_0, %1 : i32, i32
  }
  func.func @transform_5(%arg0: i32, %arg1: i32) -> (i32, i32) {
    %c1_i32 = arith.constant 1 : i32
    %0 = arith.subi %arg1, %c1_i32 : i32
    %c0_i32 = arith.constant 0 : i32
    %1 = arith.maxsi %0, %c0_i32 : i32
    %c0_i32_0 = arith.constant 0 : i32
    return %arg0, %1 : i32, i32
  }
}

</mosaic_0001>

<llo_original>
// kernel: tpu_custom_call.1
$region0: #{tpu_custom_call.1}
  #allocation0 [shape = 'u32[]', space=smem, size = 0x4, offset = 0x4, fixed_abs, tag = 'smem constant byte address 0x4 - core index']
  #allocation1 [shape = 'u32[144,128]{1,0:T(1,128)}', space=vmem, size = 0x12000, scoped, tag = 'internal scratch']
  #allocation2 [shape = 'f32[8,128]{1,0:T(8,128)}', space=vmem, size = 0x1000, scoped, tag = 'scratch operand']
  %s0 = inlined_call_operand.hbm [shape: f32[8,256], index: 0, kind: input, shape index: {}]
  %s1 = inlined_call_operand.hbm [shape: f32[128,256], index: 1, kind: input, shape index: {}]
  %s2 = inlined_call_operand.vmem [shape: f32[1,128], index: 2, kind: input, shape index: {}]
  %s3 = inlined_call_operand.hbm [shape: f32[256,128], index: 3, kind: input, shape index: {}]
  %s4 = inlined_call_operand.vmem [shape: f32[1,256], index: 4, kind: input, shape index: {}]
  %s5 = inlined_call_operand.hbm [shape: f32[8,256], index: 5, kind: output, shape index: {}]
  %s6 = sld [smem:[#allocation0]]
  $region77: #{tpu_custom_call.1} parent=0
    _
  %s8 = ssub.s32 1, %s6
  %s9 = scalar_select 0, %s8, %s6
  $region1: #{tpu_custom_call.1} parent=0
    #allocation3 [shape = 'u8[16384]{0}', space=vmem, size = 0x4000, scoped, tag = 'input window, operand 0']
    #allocation4 [shape = 's32[2]{0}', space=sflag, size = 0x8, scoped, tag = 'scoped memory for tpu_custom_call.1']
    #allocation5 [shape = 's32[2]{0}', space=sflag, size = 0x8, scoped, tag = 'scoped memory for tpu_custom_call.1']
    #allocation6 [shape = 'u8[262144]{0}', space=vmem, size = 0x40000, scoped, tag = 'input window, operand 1']
    #allocation7 [shape = 's32[2]{0}', space=sflag, size = 0x8, scoped, tag = 'scoped memory for tpu_custom_call.1']
    #allocation8 [shape = 'u8[262144]{0}', space=vmem, size = 0x40000, scoped, tag = 'input window, operand 3']
    #allocation9 [shape = 'u8[16384]{0}', space=vmem, size = 0x4000, scoped, tag = 'output window, operand 0']
    %10 = vsyncpa [#allocation4], 0
    %s11 = scalar_lea.sflag [#allocation4], 1
    %12 = vsyncpa %s11, 0
    %13 = vsyncpa [#allocation7], 0
    %s14 = scalar_lea.sflag [#allocation7], 1
    %15 = vsyncpa %s14, 0
    %16 = vsyncpa [#allocation5], 0
    %s17 = scalar_lea.sflag [#allocation5], 1
    %18 = vsyncpa %s17, 0
    loop: start=0, step=1, limit=4
    $region2: #{tpu_custom_call.1} parent=1 // loop_pre_header
      _
    $region3: #{tpu_custom_call.1} parent=1 // loop_header
      %s20 = sphi 0, %s24
      %p21 = scmp.ge.s32.totalorder %s20, 4
      %s27 = sphi 0, %s39
      %s28 = sphi 0, %s35
      %s29 = sphi 0, %s27
      %s30 = sphi 0, %s28
      %s31 = sphi 0, %s29
      %s32 = sphi 0, %s30
      %s48 = sphi 0, %s50
      %s51 = sphi 0, %s48
      %s52 = sphi 0, %s51
      %s68 = sphi 0, %s52
      %s78 = sphi 0, %s80
      %s81 = sphi 0, %s78
      %s82 = sphi 0, %s81
      %s98 = sphi 0, %s82
      %s102 = sphi 0, %s102
      %s104 = sphi 0, %s102
      %s105 = sphi 0, %s104
      %s119 = sphi 0, %s105
      %s131 = sphi 0, %s133
      %s134 = sphi 0, %s131
      %s135 = sphi 0, %s134
      %s151 = sphi 0, %s135
      %s163 = sphi 0, %s165
      %s166 = sphi 0, %s163
      %s167 = sphi 0, %s166
      %s183 = sphi 0, %s167
      %s197 = sphi 0, %s199
      %s200 = sphi 0, %s197
      %s201 = sphi 0, %s200
      %s217 = sphi 0, %s201
    $region4: #{tpu_custom_call.1} parent=1 // loop_header_branch
      %23 = sbr.rel (%p21) target = $region8
    $region5: #{tpu_custom_call.1} parent=1 // loop_body
      %s25 = ssub.s32 %s20, 1
      %s26 = ssub.s32 %s20, 2
      %s33 = sadd.s32 1, %s28
      %p34 = scmp.ge.s32.totalorder %s33, 2
      %s35 = scalar_select %p34, 0, %s33
      %s36 = sadd.s32 1, %s27
      %s37 = scalar_select %p34, %s36, %s27
      %p38 = scmp.ge.s32.totalorder %s37, 1
      %s39 = scalar_select %p38, 0, %s37
      %p40 = scmp.lt.s32.totalorder %s28, 0
      %s41 = scalar_select %p40, %s28, 0
      %p42 = scmp.lt.s32.totalorder %s35, 0
      %s43 = scalar_select %p42, %s35, 0
      %s44 = ssub.s32 %s27, %s39
      %s45 = ssub.s32 %s41, %s43
      %s46 = sor.u32 %s44, %s45
      %p47 = scmp.eq.s32.totalorder %s46, 0
      %s49 = sadd.s32 %s48, 1
      %s50 = scalar_select %p47, %s48, %s49
      %p53 = pneg %p47
      %p54 = scmp.eq.s32.totalorder %s20, 1
      %p55 = por %p53, %p54
      %p56 = scmp.ne.s32.totalorder %s48, %s51
      %p57 = scmp.eq.s32.totalorder %s20, 0
      %p58 = por %p56, %p57
      %p59 = scmp.ne.s32.totalorder %s48, %s51
      %p60 = scmp.eq.s32.totalorder %s25, 1
      %p61 = por %p59, %p60
      %p62 = scmp.ne.s32.totalorder %s51, %s52
      %p63 = scmp.eq.s32.totalorder %s25, 0
      %p64 = por %p62, %p63
      %p65 = scmp.ne.s32.totalorder %s51, %s52
      %p66 = scmp.eq.s32.totalorder %s26, 1
      %p67 = por %p65, %p66
      %p69 = scmp.ne.s32.totalorder %s52, %s68
      %p70 = scmp.eq.s32.totalorder %s26, 0
      %p71 = por %p69, %p70
      %p72 = scmp.lt.s32.totalorder %s28, 0
      %s73 = scalar_select %p72, %s28, 0
      %p74 = scmp.lt.s32.totalorder %s35, 0
      %s75 = scalar_select %p74, %s35, 0
      %s76 = ssub.s32 %s73, %s75
      %p77 = scmp.eq.s32.totalorder %s76, 0
      %s79 = sadd.s32 %s78, 1
      %s80 = scalar_select %p77, %s78, %s79
      %p83 = pneg %p77
      %p84 = scmp.eq.s32.totalorder %s20, 1
      %p85 = por %p83, %p84
      %p86 = scmp.ne.s32.totalorder %s78, %s81
      %p87 = scmp.eq.s32.totalorder %s20, 0
      %p88 = por %p86, %p87
      %p89 = scmp.ne.s32.totalorder %s78, %s81
      %p90 = scmp.eq.s32.totalorder %s25, 1
      %p91 = por %p89, %p90
      %p92 = scmp.ne.s32.totalorder %s81, %s82
      %p93 = scmp.eq.s32.totalorder %s25, 0
      %p94 = por %p92, %p93
      %p95 = scmp.ne.s32.totalorder %s81, %s82
      %p96 = scmp.eq.s32.totalorder %s26, 1
      %p97 = por %p95, %p96
      %p99 = scmp.ne.s32.totalorder %s82, %s98
      %p100 = scmp.eq.s32.totalorder %s26, 0
      %p101 = por %p99, %p100
      %s103 = sadd.s32 %s102, 1
      %p106 = scmp.eq.s32.totalorder %s20, 1
      %p107 = scmp.ne.s32.totalorder %s102, %s104
      %p108 = scmp.eq.s32.totalorder %s20, 0
      %p109 = por %p107, %p108
      %p110 = scmp.ne.s32.totalorder %s102, %s104
      %p111 = scmp.eq.s32.totalorder %s25, 1
      %p112 = por %p110, %p111
      %p113 = scmp.ne.s32.totalorder %s104, %s105
      %p114 = scmp.eq.s32.totalorder %s25, 0
      %p115 = por %p113, %p114
      %p116 = scmp.ne.s32.totalorder %s104, %s105
      %p117 = scmp.eq.s32.totalorder %s26, 1
      %p118 = por %p116, %p117
      %p120 = scmp.ne.s32.totalorder %s105, %s119
      %p121 = scmp.eq.s32.totalorder %s26, 0
      %p122 = por %p120, %p121
      %s123 = ssub.s32 %s28, 1
      %p124 = scmp.gt.s32.totalorder %s123, 0
      %s125 = scalar_select %p124, %s123, 0
      %s126 = ssub.s32 %s35, 1
      %p127 = scmp.gt.s32.totalorder %s126, 0
      %s128 = scalar_select %p127, %s126, 0
      %s129 = ssub.s32 %s125, %s128
      %p130 = scmp.eq.s32.totalorder %s129, 0
      %s132 = sadd.s32 %s131, 1
      %s133 = scalar_select %p130, %s131, %s132
      %p136 = pneg %p130
      %p137 = scmp.eq.s32.totalorder %s20, 1
      %p138 = por %p136, %p137
      %p139 = scmp.ne.s32.totalorder %s131, %s134
      %p140 = scmp.eq.s32.totalorder %s20, 0
      %p141 = por %p139, %p140
      %p142 = scmp.ne.s32.totalorder %s131, %s134
      %p143 = scmp.eq.s32.totalorder %s25, 1
      %p144 = por %p142, %p143
      %p145 = scmp.ne.s32.totalorder %s134, %s135
      %p146 = scmp.eq.s32.totalorder %s25, 0
      %p147 = por %p145, %p146
      %p148 = scmp.ne.s32.totalorder %s134, %s135
      %p149 = scmp.eq.s32.totalorder %s26, 1
      %p150 = por %p148, %p149
      %p152 = scmp.ne.s32.totalorder %s135, %s151
      %p153 = scmp.eq.s32.totalorder %s26, 0
      %p154 = por %p152, %p153
      %s155 = ssub.s32 %s28, 1
      %p156 = scmp.gt.s32.totalorder %s155, 0
      %s157 = scalar_select %p156, %s155, 0
      %s158 = ssub.s32 %s35, 1
      %p159 = scmp.gt.s32.totalorder %s158, 0
      %s160 = scalar_select %p159, %s158, 0
      %s161 = ssub.s32 %s157, %s160
      %p162 = scmp.eq.s32.totalorder %s161, 0
      %s164 = sadd.s32 %s163, 1
      %s165 = scalar_select %p162, %s163, %s164
      %p168 = pneg %p162
      %p169 = scmp.eq.s32.totalorder %s20, 1
      %p170 = por %p168, %p169
      %p171 = scmp.ne.s32.totalorder %s163, %s166
      %p172 = scmp.eq.s32.totalorder %s20, 0
      %p173 = por %p171, %p172
      %p174 = scmp.ne.s32.totalorder %s163, %s166
      %p175 = scmp.eq.s32.totalorder %s25, 1
      %p176 = por %p174, %p175
      %p177 = scmp.ne.s32.totalorder %s166, %s167
      %p178 = scmp.eq.s32.totalorder %s25, 0
      %p179 = por %p177, %p178
      %p180 = scmp.ne.s32.totalorder %s166, %s167
      %p181 = scmp.eq.s32.totalorder %s26, 1
      %p182 = por %p180, %p181
      %p184 = scmp.ne.s32.totalorder %s167, %s183
      %p185 = scmp.eq.s32.totalorder %s26, 0
      %p186 = por %p184, %p185
      %s187 = ssub.s32 %s28, 1
      %p188 = scmp.gt.s32.totalorder %s187, 0
      %s189 = scalar_select %p188, %s187, 0
      %s190 = ssub.s32 %s35, 1
      %p191 = scmp.gt.s32.totalorder %s190, 0
      %s192 = scalar_select %p191, %s190, 0
      %s193 = ssub.s32 %s27, %s39
      %s194 = ssub.s32 %s189, %s192
      %s195 = sor.u32 %s193, %s194
      %p196 = scmp.eq.s32.totalorder %s195, 0
      %s198 = sadd.s32 %s197, 1
      %s199 = scalar_select %p196, %s197, %s198
      %p202 = pneg %p196
      %p203 = scmp.eq.s32.totalorder %s20, 1
      %p204 = por %p202, %p203
      %p205 = scmp.ne.s32.totalorder %s197, %s200
      %p206 = scmp.eq.s32.totalorder %s20, 0
      %p207 = por %p205, %p206
      %p208 = scmp.ne.s32.totalorder %s197, %s200
      %p209 = scmp.eq.s32.totalorder %s25, 1
      %p210 = por %p208, %p209
      %p211 = scmp.ne.s32.totalorder %s200, %s201
      %p212 = scmp.eq.s32.totalorder %s25, 0
      %p213 = por %p211, %p212
      %p214 = scmp.ne.s32.totalorder %s200, %s201
      %p215 = scmp.eq.s32.totalorder %s26, 1
      %p216 = por %p214, %p215
      %p218 = scmp.ne.s32.totalorder %s201, %s217
      %p219 = scmp.eq.s32.totalorder %s26, 0
      %p220 = por %p218, %p219
      %p221 = scmp.le.s32.totalorder 1, %s20
      %p222 = scmp.lt.s32.totalorder %s20, 3
      %p223 = pnand %p221, %p222
      %p224 = pneg %p223
      // Predicated region
      $region9: #{tpu_custom_call.1} parent=5 // pred_check
        _
      $region10: #{tpu_custom_call.1} parent=5 // pred_check_branch
        %226 = sbr.rel (%p223) target = $region12
      $region11: #{tpu_custom_call.1} parent=5 // pred_region
        %s227 = ssub.s32 %s20, 1
        // Predicated region
        $region13: #{tpu_custom_call.1} parent=11 // pred_check
          %p228 = pneg %p115
        $region14: #{tpu_custom_call.1} parent=11 // pred_check_branch
          %230 = sbr.rel (%p228) target = $region16
        $region15: #{tpu_custom_call.1} parent=11 // pred_region
          _
        $region16: #{tpu_custom_call.1} parent=11 // pred_fallthru
          _
      $region12: #{tpu_custom_call.1} parent=5 // pred_fallthru
        _
      %p231 = scmp.lt.s32.totalorder %s20, 2
      // Predicated region
      $region17: #{tpu_custom_call.1} parent=5 // pred_check
        %p232 = pneg %p231
      $region18: #{tpu_custom_call.1} parent=5 // pred_check_branch
        %234 = sbr.rel (%p232) target = $region20
      $region19: #{tpu_custom_call.1} parent=5 // pred_region
        // Predicated region
        $region21: #{tpu_custom_call.1} parent=19 // pred_check
          %p235 = pneg %p58
        $region22: #{tpu_custom_call.1} parent=19 // pred_check_branch
          %237 = sbr.rel (%p235) target = $region24
        $region23: #{tpu_custom_call.1} parent=19 // pred_region
          %s238 = sand.u32 %s48, 1
          %s239 = scalar_lea.sflag [#allocation4], %s238
          %s240 = sand.u32 %s48, 1
          %s241 = smul.addr %s240, 16
          %s242 = scalar_lea.vmem [#allocation3], %s241
          %p243 = scmp.lt.s32.totalorder %s28, 0
          %s244 = scalar_select %p243, %s28, 0
          %s245 = smul.u32 2, %s244
          %s247 = ssub.s32 256, 256
          %248 = vsyncadd %s239, %s247
          %s249 = smul.addr %s27, 2
          %s250 = sadd.s32 %s245, %s249
          %s251 = smul.addr %s250, 128
          %s252 = scalar_lea.hbm %s0, %s251
          %s254 = sshll.u32 %s242, 4
          %s255 = int_to_ptr.vmem [resolvable:$true] %s254
          %257 = dma.hbm_to_vmem [thread:$0]  %s252, 256, %s255, %s239
        $region24: #{tpu_custom_call.1} parent=19 // pred_fallthru
          _
        // Predicated region
        $region25: #{tpu_custom_call.1} parent=19 // pred_check
          %p258 = pneg %p88
        $region26: #{tpu_custom_call.1} parent=19 // pred_check_branch
          %260 = sbr.rel (%p258) target = $region28
        $region27: #{tpu_custom_call.1} parent=19 // pred_region
          %s261 = sand.u32 %s20, 1
          %s262 = scalar_lea.sflag [#allocation7], %s261
          %s263 = sand.u32 %s78, 1
          %s264 = smul.addr %s263, 256
          %s265 = scalar_lea.vmem [#allocation6], %s264
          %p266 = scmp.lt.s32.totalorder %s28, 0
          %s267 = scalar_select %p266, %s28, 0
          %s268 = smul.u32 2, %s267
          %s270 = ssub.s32 4096, 4096
          %271 = vsyncadd %s262, %s270
          %s272 = smul.addr %s268, 128
          %s273 = scalar_lea.hbm %s1, %s272
          %s274 = sshll.u32 %s265, 4
          %s275 = int_to_ptr.vmem [resolvable:$true] %s274
          %280 = dma.hbm_to_vmem [thread:$0]  %s273, 4096, %s275, %s262, 256, 256, 16
        $region28: #{tpu_custom_call.1} parent=19 // pred_fallthru
          _
        // Predicated region
        $region29: #{tpu_custom_call.1} parent=19 // pred_check
          %p281 = pneg %p141
        $region30: #{tpu_custom_call.1} parent=19 // pred_check_branch
          %283 = sbr.rel (%p281) target = $region32
        $region31: #{tpu_custom_call.1} parent=19 // pred_region
          %s284 = sand.u32 %s20, 1
          %s285 = scalar_lea.sflag [#allocation7], %s284
          %s286 = sand.u32 %s131, 1
          %s287 = smul.addr %s286, 256
          %s288 = scalar_lea.vmem [#allocation8], %s287
          %s289 = ssub.s32 %s28, 1
          %p290 = scmp.gt.s32.totalorder %s289, 0
          %s291 = scalar_select %p290, %s289, 0
          %s292 = smul.u32 32, %s291
          %s294 = ssub.s32 4096, 4096
          %295 = vsyncadd %s285, %s294
          %s296 = smul.addr %s292, 128
          %s297 = scalar_lea.hbm %s3, %s296
          %s298 = sshll.u32 %s288, 4
          %s299 = int_to_ptr.vmem [resolvable:$true] %s298
          %304 = dma.hbm_to_vmem [thread:$0]  %s297, 4096, %s299, %s285, 128, 128, 8
        $region32: #{tpu_custom_call.1} parent=19 // pred_fallthru
          _
        // Predicated region
        $region33: #{tpu_custom_call.1} parent=19 // pred_check
          %p305 = pneg %p173
        $region34: #{tpu_custom_call.1} parent=19 // pred_check_branch
          %307 = sbr.rel (%p305) target = $region36
        $region35: #{tpu_custom_call.1} parent=19 // pred_region
          %s308 = ssub.s32 %s28, 1
          %p309 = scmp.gt.s32.totalorder %s308, 0
          %s310 = scalar_select %p309, %s308, 0
          %s311 = smul.u32 2, %s310
          %p312 = scmp.lt.s32.totalorder %s311, 1
          %s313 = scalar_select %p312, %s311, 1
          %s314 = scalar_lea.vmem %s4, %s313
          %s315 = ssub.s32 %s28, 1
          %p316 = scmp.gt.s32.totalorder %s315, 0
          %s317 = scalar_select %p316, %s315, 0
          %s318 = smul.u32 2, %s317
        $region36: #{tpu_custom_call.1} parent=19 // pred_fallthru
          _
      $region20: #{tpu_custom_call.1} parent=5 // pred_fallthru
        _
      %p319 = scmp.le.s32.totalorder 1, %s20
      %p320 = scmp.lt.s32.totalorder %s20, 3
      %p321 = pnand %p319, %p320
      %p322 = pneg %p321
      // Predicated region
      $region37: #{tpu_custom_call.1} parent=5 // pred_check
        _
      $region38: #{tpu_custom_call.1} parent=5 // pred_check_branch
        %324 = sbr.rel (%p321) target = $region40
      $region39: #{tpu_custom_call.1} parent=5 // pred_region
        %s325 = ssub.s32 %s20, 1
        %s326 = sand.u32 %s51, 1
        %s327 = scalar_lea.sflag [#allocation4], %s326
        %s328 = sand.u32 %s51, 1
        %s329 = smul.addr %s328, 16
        %s330 = scalar_lea.vmem [#allocation3], %s329
        // Predicated region
        $region41: #{tpu_custom_call.1} parent=39 // pred_check
          %p331 = pneg %p64
        $region42: #{tpu_custom_call.1} parent=39 // pred_check_branch
          %333 = sbr.rel (%p331) target = $region44
        $region43: #{tpu_custom_call.1} parent=39 // pred_region
          %334 = dma.done %s327, 256
        $region44: #{tpu_custom_call.1} parent=39 // pred_fallthru
          _
        %s335 = sand.u32 %s25, 1
        %s336 = scalar_lea.sflag [#allocation7], %s335
        %s337 = sand.u32 %s81, 1
        %s338 = smul.addr %s337, 256
        %s339 = scalar_lea.vmem [#allocation6], %s338
        // Predicated region
        $region45: #{tpu_custom_call.1} parent=39 // pred_check
          %p340 = pneg %p94
        $region46: #{tpu_custom_call.1} parent=39 // pred_check_branch
          %342 = sbr.rel (%p340) target = $region48
        $region47: #{tpu_custom_call.1} parent=39 // pred_region
          %343 = dma.done %s336, 4096
        $region48: #{tpu_custom_call.1} parent=39 // pred_fallthru
          _
        %s344 = sand.u32 %s25, 1
        %s345 = scalar_lea.sflag [#allocation7], %s344
        %s346 = sand.u32 %s134, 1
        %s347 = smul.addr %s346, 256
        %s348 = scalar_lea.vmem [#allocation8], %s347
        // Predicated region
        $region49: #{tpu_custom_call.1} parent=39 // pred_check
          %p349 = pneg %p147
        $region50: #{tpu_custom_call.1} parent=39 // pred_check_branch
          %351 = sbr.rel (%p349) target = $region52
        $region51: #{tpu_custom_call.1} parent=39 // pred_region
          %352 = dma.done %s345, 4096
        $region52: #{tpu_custom_call.1} parent=39 // pred_fallthru
          _
        %s353 = sand.u32 %s51, 1
        %s354 = scalar_lea.sflag [#allocation4], %s353
        %s355 = sand.u32 %s51, 1
        %s356 = smul.addr %s355, 16
        %s357 = scalar_lea.vmem [#allocation3], %s356
        %p358 = pneg %p64
        %p359 = pneg %p61
        %s360 = sand.u32 %s25, 1
        %s361 = scalar_lea.sflag [#allocation7], %s360
        %s362 = sand.u32 %s81, 1
        %s363 = smul.addr %s362, 256
        %s364 = scalar_lea.vmem [#allocation6], %s363
        %p365 = pneg %p94
        %p366 = pneg %p91
        %p367 = pneg %p115
        %p368 = pneg %p112
        %s369 = sand.u32 %s25, 1
        %s370 = scalar_lea.sflag [#allocation7], %s369
        %s371 = sand.u32 %s134, 1
        %s372 = smul.addr %s371, 256
        %s373 = scalar_lea.vmem [#allocation8], %s372
        %p374 = pneg %p147
        %p375 = pneg %p144
        %s376 = ssub.s32 %s30, 1
        %p377 = scmp.gt.s32.totalorder %s376, 0
        %s378 = scalar_select %p377, %s376, 0
        %s379 = smul.u32 2, %s378
        %p380 = scmp.lt.s32.totalorder %s379, 1
        %s381 = scalar_select %p380, %s379, 1
        %s382 = scalar_lea.vmem %s4, %s381
        %p383 = pneg %p179
        %p384 = pneg %p176
        %p385 = pneg %p213
        %p386 = pneg %p210
        %s387 = sand.u32 %s200, 1
        %s388 = scalar_lea.sflag [#allocation5], %s387
        %s389 = sand.u32 %s200, 1
        %s390 = smul.addr %s389, 16
        %s391 = scalar_lea.vmem [#allocation9], %s390
        %p392 = scmp.lt.s32.totalorder %s30, 0
        %s393 = scalar_select %p392, %s30, 0
        %s394 = smul.u32 2, %s393
        %p395 = scmp.lt.s32.totalorder %s30, 0
        %s396 = scalar_select %p395, %s30, 0
        %s397 = smul.u32 2, %s396
        %s398 = ssub.s32 %s30, 1
        %p399 = scmp.gt.s32.totalorder %s398, 0
        %s400 = scalar_select %p399, %s398, 0
        %s401 = smul.u32 32, %s400
        %s402 = ssub.s32 %s30, 1
        %p403 = scmp.gt.s32.totalorder %s402, 0
        %s404 = scalar_select %p403, %s402, 0
        %s405 = smul.u32 2, %s404
        %p406 = scmp.lt.s32.totalorder %s405, 1
        %s407 = scalar_select %p406, %s405, 1
        %s408 = scalar_lea.vmem %s4, %s407
        %s409 = ssub.s32 %s30, 1
        %p410 = scmp.gt.s32.totalorder %s409, 0
        %s411 = scalar_select %p410, %s409, 0
        %s412 = smul.u32 2, %s411
        %s413 = ssub.s32 %s30, 1
        %p414 = scmp.gt.s32.totalorder %s413, 0
        %s415 = scalar_select %p414, %s413, 0
        %s416 = smul.u32 2, %s415
        %p417 = scmp.eq.s32.totalorder %s30, 0
        // Predicated region
        $region53: #{tpu_custom_call.1} parent=39 // pred_check
          %p418 = pneg %p417
        $region54: #{tpu_custom_call.1} parent=39 // pred_check_branch
          %420 = sbr.rel (%p418) target = $region56
        $region55: #{tpu_custom_call.1} parent=39 // pred_region
          %v421 = vld [vmem:[%s2] sm:$0x1]
          %v423 = vlaneseq
          %v424 = vshrl.u32 %v423, 7
          %v425 = vsub.s32 0, %v424
          %v426 = vrot.slane %v421, %v425
          %428 = vst [vmem:[#allocation2] sm:$0xff] %v426
        $region56: #{tpu_custom_call.1} parent=39 // pred_fallthru
          _
        %p429 = scmp.lt.s32.totalorder %s30, 1
        // Predicated region
        $region57: #{tpu_custom_call.1} parent=39 // pred_check
          %p430 = pneg %p429
        $region58: #{tpu_custom_call.1} parent=39 // pred_check_branch
          %432 = sbr.rel (%p430) target = $region60
        $region59: #{tpu_custom_call.1} parent=39 // pred_region
          %v433 = vld [vmem:[%s339] sm:$0xff]
          %v434 = vld [vmem:[%s339 + $0x8] sm:$0xff]
          %v435 = vld [vmem:[%s339 + $0x10] sm:$0xff]
          %v436 = vld [vmem:[%s339 + $0x18] sm:$0xff]
          %v437 = vld [vmem:[%s339 + $0x20] sm:$0xff]
          %v438 = vld [vmem:[%s339 + $0x28] sm:$0xff]
          %v439 = vld [vmem:[%s339 + $0x30] sm:$0xff]
          %v440 = vld [vmem:[%s339 + $0x38] sm:$0xff]
          %v441 = vld [vmem:[%s339 + $0x40] sm:$0xff]
          %v442 = vld [vmem:[%s339 + $0x48] sm:$0xff]
          %v443 = vld [vmem:[%s339 + $0x50] sm:$0xff]
          %v444 = vld [vmem:[%s339 + $0x58] sm:$0xff]
          %v445 = vld [vmem:[%s339 + $0x60] sm:$0xff]
          %v446 = vld [vmem:[%s339 + $0x68] sm:$0xff]
          %v447 = vld [vmem:[%s339 + $0x70] sm:$0xff]
          %v448 = vld [vmem:[%s339 + $0x78] sm:$0xff]
          %v449 = vld [vmem:[%s339 + $0x80] sm:$0xff]
          %v450 = vld [vmem:[%s339 + $0x88] sm:$0xff]
          %v451 = vld [vmem:[%s339 + $0x90] sm:$0xff]
          %v452 = vld [vmem:[%s339 + $0x98] sm:$0xff]
          %v453 = vld [vmem:[%s339 + $0xa0] sm:$0xff]
          %v454 = vld [vmem:[%s339 + $0xa8] sm:$0xff]
          %v455 = vld [vmem:[%s339 + $0xb0] sm:$0xff]
          %v456 = vld [vmem:[%s339 + $0xb8] sm:$0xff]
          %v457 = vld [vmem:[%s339 + $0xc0] sm:$0xff]
          %v458 = vld [vmem:[%s339 + $0xc8] sm:$0xff]
          %v459 = vld [vmem:[%s339 + $0xd0] sm:$0xff]
          %v460 = vld [vmem:[%s339 + $0xd8] sm:$0xff]
          %v461 = vld [vmem:[%s339 + $0xe0] sm:$0xff]
          %v462 = vld [vmem:[%s339 + $0xe8] sm:$0xff]
          %v463 = vld [vmem:[%s339 + $0xf0] sm:$0xff]
          %v464 = vld [vmem:[%s339 + $0xf8] sm:$0xff]
          %v465 = vld [vmem:[%s330] sm:$0xff]
          %v466 = vld [vmem:[%s330 + $0x8] sm:$0xff]
          %v467 = vld [vmem:[#allocation2] sm:$0xff]
          %468 = vmatprep.subr.mxu0 %v434
          %469 = vmatpush1.xpose.msra.mxu0 %v433
          %470 = vmatprep.subr.mxu0 %v436
          %471 = vmatpush1.xpose.msra.mxu0 %v435
          %472 = vmatprep.subr.mxu0 %v438
          %473 = vmatpush1.xpose.msra.mxu0 %v437
          %474 = vmatprep.subr.mxu0 %v440
          %475 = vmatpush1.xpose.msra.mxu0 %v439
          %476 = vmatprep.subr.mxu0 %v442
          %477 = vmatpush1.xpose.msra.mxu0 %v441
          %478 = vmatprep.subr.mxu0 %v444
          %479 = vmatpush1.xpose.msra.mxu0 %v443
          %480 = vmatprep.subr.mxu0 %v446
          %481 = vmatpush1.xpose.msra.mxu0 %v445
          %482 = vmatprep.subr.mxu0 %v448
          %483 = vmatpush1.xpose.msra.mxu0 %v447
          %484 = vmatprep.subr.mxu0 %v450
          %485 = vmatpush1.xpose.msra.mxu0 %v449
          %486 = vmatprep.subr.mxu0 %v452
          %487 = vmatpush1.xpose.msra.mxu0 %v451
          %488 = vmatprep.subr.mxu0 %v454
          %489 = vmatpush1.xpose.msra.mxu0 %v453
          %490 = vmatprep.subr.mxu0 %v456
          %491 = vmatpush1.xpose.msra.mxu0 %v455
          %492 = vmatprep.subr.mxu0 %v458
          %493 = vmatpush1.xpose.msra.mxu0 %v457
          %494 = vmatprep.subr.mxu0 %v460
          %495 = vmatpush1.xpose.msra.mxu0 %v459
          %496 = vmatprep.subr.mxu0 %v462
          %497 = vmatpush1.xpose.msra.mxu0 %v461
          %498 = vmatprep.subr.mxu0 %v464
          %499 = vmatpush1.xpose.msra.mxu0 %v463
          %500 = vmatprep.subr.mxu0 0.0
          %501 = vmatpush1.xpose.msra.mxu0 0.0
          %502 = vmatprep.subr.mxu0 0.0
          %503 = vmatpush1.xpose.msra.mxu0 0.0
          %504 = vmatprep.subr.mxu0 0.0
          %505 = vmatpush1.xpose.msra.mxu0 0.0
          %506 = vmatprep.subr.mxu0 0.0
          %507 = vmatpush1.xpose.msra.mxu0 0.0
          %508 = vmatprep.subr.mxu0 0.0
          %509 = vmatpush1.xpose.msra.mxu0 0.0
          %510 = vmatprep.subr.mxu0 0.0
          %511 = vmatpush1.xpose.msra.mxu0 0.0
          %512 = vmatprep.subr.mxu0 0.0
          %513 = vmatpush1.xpose.msra.mxu0 0.0
          %514 = vmatprep.subr.mxu0 0.0
          %515 = vmatpush1.xpose.msra.mxu0 0.0
          %516 = vmatprep.subr.mxu0 0.0
          %517 = vmatpush1.xpose.msra.mxu0 0.0
          %518 = vmatprep.subr.mxu0 0.0
          %519 = vmatpush1.xpose.msra.mxu0 0.0
          %520 = vmatprep.subr.mxu0 0.0
          %521 = vmatpush1.xpose.msra.mxu0 0.0
          %522 = vmatprep.subr.mxu0 0.0
          %523 = vmatpush1.xpose.msra.mxu0 0.0
          %524 = vmatprep.subr.mxu0 0.0
          %525 = vmatpush1.xpose.msra.mxu0 0.0
          %526 = vmatprep.subr.mxu0 0.0
          %527 = vmatpush1.xpose.msra.mxu0 0.0
          %528 = vmatprep.subr.mxu0 0.0
          %529 = vmatpush1.xpose.msra.mxu0 0.0
          %530 = vmatprep.subr.mxu0 0.0
          %531 = vmatpush1.xpose.msra.mxu0 0.0
          %532 = vmatprep.mubr.f32.mxu0 %v466
          %533 = vmatmul.mubr.f32.gmra.mrb[0].mxu0 %v465
          %v534 = vpop.f32.mrb[0].mxu0
          %v535 = vadd.f32 0.0, %v534
          %v536 = vpop.f32.mrb[0].mxu0
          %537 = vdwg.mxu0
          %v538 = vadd.f32 %v467, %v535
          %539 = vst [vmem:[#allocation2] sm:$0xff] %v538
        $region60: #{tpu_custom_call.1} parent=39 // pred_fallthru
          _
        %p540 = scmp.ge.s32.totalorder %s30, 1
        // Predicated region
        $region61: #{tpu_custom_call.1} parent=39 // pred_check
          %p541 = pneg %p540
        $region62: #{tpu_custom_call.1} parent=39 // pred_check_branch
          %543 = sbr.rel (%p541) target = $region64
        $region63: #{tpu_custom_call.1} parent=39 // pred_region
          %v544 = vld [vmem:[%s348] sm:$0xff]
          %v545 = vld [vmem:[%s348 + $0x8] sm:$0xff]
          %v546 = vld [vmem:[%s348 + $0x10] sm:$0xff]
          %v547 = vld [vmem:[%s348 + $0x18] sm:$0xff]
          %v548 = vld [vmem:[%s348 + $0x20] sm:$0xff]
          %v549 = vld [vmem:[%s348 + $0x28] sm:$0xff]
          %v550 = vld [vmem:[%s348 + $0x30] sm:$0xff]
          %v551 = vld [vmem:[%s348 + $0x38] sm:$0xff]
          %v552 = vld [vmem:[%s348 + $0x40] sm:$0xff]
          %v553 = vld [vmem:[%s348 + $0x48] sm:$0xff]
          %v554 = vld [vmem:[%s348 + $0x50] sm:$0xff]
          %v555 = vld [vmem:[%s348 + $0x58] sm:$0xff]
          %v556 = vld [vmem:[%s348 + $0x60] sm:$0xff]
          %v557 = vld [vmem:[%s348 + $0x68] sm:$0xff]
          %v558 = vld [vmem:[%s348 + $0x70] sm:$0xff]
          %v559 = vld [vmem:[%s348 + $0x78] sm:$0xff]
          %v560 = vld [vmem:[%s348 + $0x80] sm:$0xff]
          %v561 = vld [vmem:[%s348 + $0x88] sm:$0xff]
          %v562 = vld [vmem:[%s348 + $0x90] sm:$0xff]
          %v563 = vld [vmem:[%s348 + $0x98] sm:$0xff]
          %v564 = vld [vmem:[%s348 + $0xa0] sm:$0xff]
          %v565 = vld [vmem:[%s348 + $0xa8] sm:$0xff]
          %v566 = vld [vmem:[%s348 + $0xb0] sm:$0xff]
          %v567 = vld [vmem:[%s348 + $0xb8] sm:$0xff]
          %v568 = vld [vmem:[%s348 + $0xc0] sm:$0xff]
          %v569 = vld [vmem:[%s348 + $0xc8] sm:$0xff]
          %v570 = vld [vmem:[%s348 + $0xd0] sm:$0xff]
          %v571 = vld [vmem:[%s348 + $0xd8] sm:$0xff]
          %v572 = vld [vmem:[%s348 + $0xe0] sm:$0xff]
          %v573 = vld [vmem:[%s348 + $0xe8] sm:$0xff]
          %v574 = vld [vmem:[%s348 + $0xf0] sm:$0xff]
          %v575 = vld [vmem:[%s348 + $0xf8] sm:$0xff]
          %v576 = vld [vmem:[#allocation2] sm:$0xff]
          %v577 = vld [vmem:[%s408] sm:$0x3]
          %v579 = vlaneseq
          %v580 = vshrl.u32 %v579, 7
          %v581 = vsub.s32 0, %v580
          %v582 = vrot.slane %v577, %v581
          %v583 = vlaneseq
          %v584 = vshrl.u32 %v583, 7
          %v585 = vsub.s32 1, %v584
          %v586 = vrot.slane %v577, %v585
          %589 = vmatprep.subr.mxu0 0.0
          %590 = vmatpush1.xpose.msra.mxu0 %v544
          %591 = vmatprep.subr.mxu0 0.0
          %592 = vmatpush1.xpose.msra.mxu0 %v545
          %593 = vmatprep.subr.mxu0 0.0
          %594 = vmatpush1.xpose.msra.mxu0 %v546
          %595 = vmatprep.subr.mxu0 0.0
          %596 = vmatpush1.xpose.msra.mxu0 %v547
          %597 = vmatprep.subr.mxu0 0.0
          %598 = vmatpush1.xpose.msra.mxu0 %v548
          %599 = vmatprep.subr.mxu0 0.0
          %600 = vmatpush1.xpose.msra.mxu0 %v549
          %601 = vmatprep.subr.mxu0 0.0
          %602 = vmatpush1.xpose.msra.mxu0 %v550
          %603 = vmatprep.subr.mxu0 0.0
          %604 = vmatpush1.xpose.msra.mxu0 %v551
          %605 = vmatprep.subr.mxu0 0.0
          %606 = vmatpush1.xpose.msra.mxu0 %v552
          %607 = vmatprep.subr.mxu0 0.0
          %608 = vmatpush1.xpose.msra.mxu0 %v553
          %609 = vmatprep.subr.mxu0 0.0
          %610 = vmatpush1.xpose.msra.mxu0 %v554
          %611 = vmatprep.subr.mxu0 0.0
          %612 = vmatpush1.xpose.msra.mxu0 %v555
          %613 = vmatprep.subr.mxu0 0.0
          %614 = vmatpush1.xpose.msra.mxu0 %v556
          %615 = vmatprep.subr.mxu0 0.0
          %616 = vmatpush1.xpose.msra.mxu0 %v557
          %617 = vmatprep.subr.mxu0 0.0
          %618 = vmatpush1.xpose.msra.mxu0 %v558
          %619 = vmatprep.subr.mxu0 0.0
          %620 = vmatpush1.xpose.msra.mxu0 %v559
          %621 = vmatprep.subr.mxu0 0.0
          %622 = vmatpush1.xpose.msra.mxu0 %v560
          %623 = vmatprep.subr.mxu0 0.0
          %624 = vmatpush1.xpose.msra.mxu0 %v561
          %625 = vmatprep.subr.mxu0 0.0
          %626 = vmatpush1.xpose.msra.mxu0 %v562
          %627 = vmatprep.subr.mxu0 0.0
          %628 = vmatpush1.xpose.msra.mxu0 %v563
          %629 = vmatprep.subr.mxu0 0.0
          %630 = vmatpush1.xpose.msra.mxu0 %v564
          %631 = vmatprep.subr.mxu0 0.0
          %632 = vmatpush1.xpose.msra.mxu0 %v565
          %633 = vmatprep.subr.mxu0 0.0
          %634 = vmatpush1.xpose.msra.mxu0 %v566
          %635 = vmatprep.subr.mxu0 0.0
          %636 = vmatpush1.xpose.msra.mxu0 %v567
          %637 = vmatprep.subr.mxu0 0.0
          %638 = vmatpush1.xpose.msra.mxu0 %v568
          %639 = vmatprep.subr.mxu0 0.0
          %640 = vmatpush1.xpose.msra.mxu0 %v569
          %641 = vmatprep.subr.mxu0 0.0
          %642 = vmatpush1.xpose.msra.mxu0 %v570
          %643 = vmatprep.subr.mxu0 0.0
          %644 = vmatpush1.xpose.msra.mxu0 %v571
          %645 = vmatprep.subr.mxu0 0.0
          %646 = vmatpush1.xpose.msra.mxu0 %v572
          %647 = vmatprep.subr.mxu0 0.0
          %648 = vmatpush1.xpose.msra.mxu0 %v573
          %649 = vmatprep.subr.mxu0 0.0
          %650 = vmatpush1.xpose.msra.mxu0 %v574
          %651 = vmatprep.subr.mxu0 0.0
          %652 = vmatpush1.xpose.msra.mxu0 %v575
          %653 = vmatprep.mubr.f32.mxu0 0.0
          %654 = vmatmul.mubr.f32.gmra.mrb[0].mxu0 %v576
          %v655 = vpop.f32.mrb[0].mxu0
          %v656 = vadd.f32 %v582, %v655
          %v657 = vpop.f32.mrb[0].mxu0
          %v658 = vadd.f32 %v586, %v657
          %659 = vdwg.mxu0
          %660 = vst [vmem:[%s391] sm:$0xff] %v656
          %661 = vst [vmem:[%s391 + $0x8] sm:$0xff] %v658
        $region64: #{tpu_custom_call.1} parent=39 // pred_fallthru
          _
        %s662 = sand.u32 %s200, 1
        %s663 = scalar_lea.sflag [#allocation5], %s662
        %s664 = sand.u32 %s200, 1
        %s665 = smul.addr %s664, 16
        %s666 = scalar_lea.vmem [#allocation9], %s665
        // Predicated region
        $region65: #{tpu_custom_call.1} parent=39 // pred_check
          %p667 = pneg %p210
        $region66: #{tpu_custom_call.1} parent=39 // pred_check_branch
          %669 = sbr.rel (%p667) target = $region68
        $region67: #{tpu_custom_call.1} parent=39 // pred_region
          %s670 = ssub.s32 %s30, 1
          %p671 = scmp.gt.s32.totalorder %s670, 0
          %s672 = scalar_select %p671, %s670, 0
          %s673 = smul.u32 2, %s672
          %s675 = ssub.s32 256, 256
          %676 = vsyncadd %s663, %s675
          %s677 = smul.addr %s29, 2
          %s678 = sadd.s32 %s673, %s677
          %s679 = smul.addr %s678, 128
          %s680 = scalar_lea.hbm %s5, %s679
          %s682 = sshll.u32 %s666, 4
          %s683 = int_to_ptr.vmem [resolvable:$true] %s682
          %685 = dma.vmem_to_hbm [thread:$0]  %s683, 256, %s680, %s663
        $region68: #{tpu_custom_call.1} parent=39 // pred_fallthru
          _
      $region40: #{tpu_custom_call.1} parent=5 // pred_fallthru
        _
      %p686 = scmp.le.s32.totalorder 2, %s20
      // Predicated region
      $region69: #{tpu_custom_call.1} parent=5 // pred_check
        %p687 = pneg %p686
      $region70: #{tpu_custom_call.1} parent=5 // pred_check_branch
        %689 = sbr.rel (%p687) target = $region72
      $region71: #{tpu_custom_call.1} parent=5 // pred_region
        %s690 = ssub.s32 %s20, 2
        // Predicated region
        $region73: #{tpu_custom_call.1} parent=71 // pred_check
          %p691 = pneg %p216
        $region74: #{tpu_custom_call.1} parent=71 // pred_check_branch
          %693 = sbr.rel (%p691) target = $region76
        $region75: #{tpu_custom_call.1} parent=71 // pred_region
          %s694 = sand.u32 %s201, 1
          %s695 = scalar_lea.sflag [#allocation5], %s694
          %s696 = sand.u32 %s201, 1
          %s697 = smul.addr %s696, 16
          %s698 = scalar_lea.vmem [#allocation9], %s697
          %699 = dma.done %s695, 256
        $region76: #{tpu_custom_call.1} parent=71 // pred_fallthru
          _
      $region72: #{tpu_custom_call.1} parent=5 // pred_fallthru
        _
    $region6: #{tpu_custom_call.1} parent=1 // loop_footer
      %s24 = sadd.s32 1, %s20
    $region7: #{tpu_custom_call.1} parent=1 // loop_footer_branch
      %19 = sbr.rel target = $region3
    $region8: #{tpu_custom_call.1} parent=1 // loop_exit
      _
    %700 = vsyncpa [#allocation4], 1
    %s701 = scalar_lea.sflag [#allocation4], 1
    %702 = vsyncpa %s701, 1
    %703 = vsyncpa [#allocation7], 1
    %s704 = scalar_lea.sflag [#allocation7], 1
    %705 = vsyncpa %s704, 1
    %706 = vsyncpa [#allocation5], 1
    %s707 = scalar_lea.sflag [#allocation5], 1
    %708 = vsyncpa %s707, 1

</llo_original>
